<compile_context>
chip_gen: v5e
topology: v5e:2x2
jax: 0.10.0
libtpu: 0.0.40
codegen_flags: <defaults>
</compile_context>

<pallas_src>
import math
from functools import partial

import jax
import jax.numpy as jnp
from jax.experimental import pallas as pl
from jax.experimental.pallas import tpu as pltpu


def _round_up(n, m):
    return ((n + m - 1) // m) * m


# --------------------------------------------------------------------------
# Kernel
# --------------------------------------------------------------------------
def _mlp_kernel(x_ref, w_ref, b_ref, o_ref, *, F, W2_ROW0, H_pad, A_pad):
    """Fused MLP forward on one batch tile.

    x_ref: (TB, F)               f32 activations
    w_ref: (W2_ROW0 + H_pad, C)  bf16 packed weights: w1 rows [0, F),
                                 w2 rows [W2_ROW0, W2_ROW0 + H_pad)
    b_ref: (16, C)               f32 biases: b1 at row 0, b2 at row 8
    o_ref: (TB, A_pad)           f32 logits (lane-dense, actions zero-padded)
    """
    # bf16 operands, f32 accumulation -> full-rate MXU on all generations.
    x = x_ref[...].astype(jnp.bfloat16)                       # (TB, F)
    w1 = w_ref[0:F, 0:H_pad]                                  # (F, H_pad)     bf16
    w2 = w_ref[W2_ROW0:W2_ROW0 + H_pad, 0:A_pad]              # (H_pad, A_pad) bf16
    b1 = b_ref[0:1, 0:H_pad]                                  # (1, H_pad)     f32
    b2 = b_ref[8:9, 0:A_pad]                                  # (1, A_pad)     f32

    h = jnp.dot(x, w1, preferred_element_type=jnp.float32) + b1
    h = jnp.maximum(h, 0.0)                                   # VPU, free under MXU
    out = jnp.dot(h.astype(jnp.bfloat16), w2,
                  preferred_element_type=jnp.float32) + b2
    o_ref[...] = out                                          # lane-dense store


# --------------------------------------------------------------------------
# Parameter packing (run ONCE per parameter update, outside the hot path)
# --------------------------------------------------------------------------
def pack_weights(w1, w2):
    """Pack w1 (F,H) and w2 (H,A) into one 16-row-aligned bf16 slab.

    Row layout (zero padding everywhere else):
      [0, F)                      w1
      [W2_ROW0, W2_ROW0 + H)      w2   with W2_ROW0 = round_up(F, 16)
    Columns padded to 128 multiples; padded rows/cols contribute nothing.
    """
    F, H = w1.shape
    H2, A = w2.shape
    assert H2 == H
    H_pad = _round_up(H, 128)
    A_pad = _round_up(A, 128)
    cols = max(H_pad, A_pad)
    W2_ROW0 = _round_up(F, 16)
    rows = W2_ROW0 + H_pad

    slab = jnp.zeros((rows, cols), jnp.bfloat16)
    slab = slab.at[0:F, 0:H].set(w1.astype(jnp.bfloat16))
    slab = slab.at[W2_ROW0:W2_ROW0 + H, 0:A].set(w2.astype(jnp.bfloat16))
    return slab


def pack_biases(b1, b2, hidden_size, actions_n):
    """Pack b1/b2 into a tiny (16, C) f32 block; b1 at row 0, b2 at row 8."""
    H_pad = _round_up(hidden_size, 128)
    A_pad = _round_up(actions_n, 128)
    cols = max(H_pad, A_pad)
    blk = jnp.zeros((16, cols), jnp.float32)
    blk = blk.at[0:1, 0:hidden_size].set(
        b1.reshape(1, hidden_size).astype(jnp.float32))
    blk = blk.at[8:9, 0:actions_n].set(
        b2.reshape(1, actions_n).astype(jnp.float32))
    return blk


# --------------------------------------------------------------------------
# Batch tiling
# --------------------------------------------------------------------------
def _tiling(batch):
    """Pick (tile, grid_steps, padded_batch).

    Batch is padded to a multiple of 8.  Once batch >= 16, the tile is capped
    at batch//2 so there are >= 2 grid steps (v7x megacore); the max tile is
    2048 to amortize per-step overhead on single-TC chips (v5e/v6e).  VMEM
    footprint is tiny at all these sizes, so bigger tiles cost nothing.
    """
    b8 = _round_up(batch, 8)
    cap = b8 // 2 if b8 >= 16 else b8
    tb = b8
    for cand in (2048, 1024, 512, 256, 128, 64, 32, 16, 8):
        if cand <= cap:
            tb = cand
            break
    steps = pl.cdiv(b8, tb)
    return tb, steps, steps * tb


# --------------------------------------------------------------------------
# Forward
# --------------------------------------------------------------------------
def net_forward(x, w_slab, b_slab, *, actions_n):
    """Forward pass of Net as a single Pallas TPU kernel.

    x:      (B, input_shpe)  f32
    w_slab: bf16 slab from pack_weights()
    b_slab: f32 block from pack_biases()
    returns: (B, actions_n) f32 raw logits (no softmax — matches PyTorch Net).
    """
    batch, F = x.shape
    W2_ROW0 = _round_up(F, 16)
    H_pad = w_slab.shape[0] - W2_ROW0
    A_pad = _round_up(actions_n, 128)

    TB, steps, padded_batch = _tiling(batch)
    if padded_batch != batch:
        x = jnp.pad(x, ((0, padded_batch - batch), (0, 0)))

    kernel = partial(_mlp_kernel, F=F, W2_ROW0=W2_ROW0, H_pad=H_pad, A_pad=A_pad)

    out_padded = pl.pallas_call(
        kernel,
        out_shape=jax.ShapeDtypeStruct((padded_batch, A_pad), jnp.float32),
        grid_spec=pltpu.PrefetchScalarGridSpec(
            num_scalar_prefetch=0,
            grid=(steps,),
            in_specs=[
                # Activation tile: software-pipelined over the batch grid.
                pl.BlockSpec((TB, F), lambda i: (i, 0)),
                # Weight slab: constant index_map -> stays VMEM-resident.
                pl.BlockSpec(w_slab.shape, lambda i: (0, 0)),
                # Bias block: constant index_map -> stays VMEM-resident.
                pl.BlockSpec(b_slab.shape, lambda i: (0, 0)),
            ],
            out_specs=pl.BlockSpec((TB, A_pad), lambda i: (i, 0)),
        ),
        compiler_params=pltpu.CompilerParams(
            dimension_semantics=("parallel",),  # megacore sharding on v7x
        ),
    )(x, w_slab, b_slab)

    return out_padded[:batch, :actions_n]


# --------------------------------------------------------------------------
# Init helpers + self-test
# --------------------------------------------------------------------------
def init_linear_params(key, in_features, out_features):
    """Deterministic init mimicking PyTorch nn.Linear default (U[-1/sqrt(in), 1/sqrt(in)])."""
    k_w, k_b = jax.random.split(key)
    bound = 1.0 / math.sqrt(in_features)
    # Stored as (in, out) so the kernel can do x @ W directly.
    w = jax.random.uniform(
        k_w, (in_features, out_features), minval=-bound, maxval=bound, dtype=jnp.float32
    )
    b = jax.random.uniform(
        k_b, (1, out_features), minval=-bound, maxval=bound, dtype=jnp.float32
    )
    return w, b


if __name__ == "__main__":
    # CartPole-ish sizes, kept small: observation dim 4, hidden 32, 2 actions.
    batch = 2
    input_shpe = 4
    hidden_size = 32
    actions_n = 2

    key = jax.random.PRNGKey(0)
    k_x, k_l1, k_l2 = jax.random.split(key, 3)

    x = jax.random.normal(k_x, (batch, input_shpe), dtype=jnp.float32)
    w1, b1 = init_linear_params(k_l1, input_shpe, hidden_size)
    w2, b2 = init_linear_params(k_l2, hidden_size, actions_n)

    # Pack parameters ONCE (outside the per-call hot path).
    w_slab = jax.block_until_ready(pack_weights(w1, w2))
    b_slab = jax.block_until_ready(pack_biases(b1, b2, hidden_size, actions_n))

    fwd = jax.jit(net_forward, static_argnames=("actions_n",))
    out = fwd(x, w_slab, b_slab, actions_n=actions_n)
    out = jax.block_until_ready(out)
    assert out.shape == (batch, actions_n)

    # Reference 1: same bf16-operand / f32-accumulate math as the kernel.
    xb = x.astype(jnp.bfloat16)
    w1b = w1.astype(jnp.bfloat16)
    w2b = w2.astype(jnp.bfloat16)
    h_ref = jnp.maximum(jnp.dot(xb, w1b, preferred_element_type=jnp.float32) + b1, 0.0)
    ref_bf16 = jnp.dot(h_ref.astype(jnp.bfloat16), w2b,
                       preferred_element_type=jnp.float32) + b2
    assert jnp.allclose(out, ref_bf16, atol=2e-3, rtol=2e-3)

    # Reference 2: full-f32 PyTorch-equivalent math (looser tol due to bf16 operands).
    ref_f32 = jnp.maximum(x @ w1 + b1, 0.0) @ w2 + b2
    assert jnp.allclose(out, ref_f32, atol=5e-2, rtol=5e-2)

    print("KERNEL_OK")
</pallas_src>

<mosaic_0001>
module attributes {stable_mosaic.version = 11 : i64} {
  func.func @_mlp_kernel(%arg0: i32, %arg1: memref<8x4xf32, #tpu.memory_space<vmem>>, %arg2: memref<144x128xbf16, #tpu.memory_space<vmem>>, %arg3: memref<16x128xf32, #tpu.memory_space<vmem>>, %arg4: memref<8x128xf32, #tpu.memory_space<vmem>>) attributes {dimension_semantics = [#tpu.dimension_semantics<parallel>], iteration_bounds = array<i64: 1>, scalar_prefetch = 0 : i64, scratch_operands = 0 : i64, tpu.core_type = #tpu.core_type<tc>, window_params = [{transform_indices = @transform_0, window_bounds = array<i64: 8, 4>}, {pipeline_mode = #tpu.pipeline_mode<synchronous>, transform_indices = @transform_1, window_bounds = array<i64: 144, 128>}, {pipeline_mode = #tpu.pipeline_mode<synchronous>, transform_indices = @transform_2, window_bounds = array<i64: 16, 128>}, {transform_indices = @transform_3, window_bounds = array<i64: 8, 128>}]} {
    %c0 = arith.constant 0 : index
    %c0_0 = arith.constant 0 : index
    %0 = vector.load %arg1[%c0, %c0_0] : memref<8x4xf32, #tpu.memory_space<vmem>>, vector<8x4xf32>
    %1 = arith.truncf %0 : vector<8x4xf32> to vector<8x4xbf16>
    %c0_1 = arith.constant 0 : index
    %c0_2 = arith.constant 0 : index
    %2 = vector.load %arg2[%c0_1, %c0_2] : memref<144x128xbf16, #tpu.memory_space<vmem>>, vector<4x128xbf16>
    %c16 = arith.constant 16 : index
    %c0_3 = arith.constant 0 : index
    %3 = vector.load %arg2[%c16, %c0_3] : memref<144x128xbf16, #tpu.memory_space<vmem>>, vector<128x128xbf16>
    %c0_4 = arith.constant 0 : index
    %c0_5 = arith.constant 0 : index
    %4 = vector.load %arg3[%c0_4, %c0_5] : memref<16x128xf32, #tpu.memory_space<vmem>>, vector<1x128xf32>
    %c8 = arith.constant 8 : index
    %c0_6 = arith.constant 0 : index
    %5 = vector.load %arg3[%c8, %c0_6] : memref<16x128xf32, #tpu.memory_space<vmem>>, vector<1x128xf32>
    %cst = arith.constant dense<0.000000e+00> : vector<8x128xf32>
    %6 = tpu.matmul %1, %2, %cst {dimension_numbers = #tpu.dot_dimension_numbers<[1], [0], [0], [1], [0, 0, 1, 1], [], []>} : vector<8x4xbf16>, vector<4x128xbf16>, vector<8x128xf32> -> vector<8x128xf32>
    %7 = vector.broadcast %4 : vector<1x128xf32> to vector<8x128xf32>
    %8 = arith.addf %6, %7 : vector<8x128xf32>
    %cst_7 = arith.constant 0.000000e+00 : f32
    %9 = vector.broadcast %cst_7 : f32 to vector<8x128xf32>
    %10 = arith.maximumf %8, %9 : vector<8x128xf32>
    %11 = arith.truncf %10 : vector<8x128xf32> to vector<8x128xbf16>
    %cst_8 = arith.constant dense<0.000000e+00> : vector<8x128xf32>
    %12 = tpu.matmul %11, %3, %cst_8 {dimension_numbers = #tpu.dot_dimension_numbers<[1], [0], [0], [1], [0, 0, 1, 1], [], []>} : vector<8x128xbf16>, vector<128x128xbf16>, vector<8x128xf32> -> vector<8x128xf32>
    %13 = vector.broadcast %5 : vector<1x128xf32> to vector<8x128xf32>
    %14 = arith.addf %12, %13 : vector<8x128xf32>
    %c0_9 = arith.constant 0 : index
    %c0_10 = arith.constant 0 : index
    %15 = vector.load %arg4[%c0_9, %c0_10] : memref<8x128xf32, #tpu.memory_space<vmem>>, vector<8x128xf32>
    tpu.vector_store %arg4[%c0_9, %c0_10], %14 {strides = array<i32>} : memref<8x128xf32, #tpu.memory_space<vmem>>, vector<8x128xf32>,
    return
  }
  func.func @transform_0(%arg0: i32) -> (i32, i32) {
    %c0_i32 = arith.constant 0 : i32
    %c0_i32_0 = arith.constant 0 : i32
    return %arg0, %c0_i32 : i32, i32
  }
  func.func @transform_1(%arg0: i32) -> (i32, i32) {
    %c0_i32 = arith.constant 0 : i32
    %c0_i32_0 = arith.constant 0 : i32
    %c0_i32_1 = arith.constant 0 : i32
    return %c0_i32, %c0_i32_0 : i32, i32
  }
  func.func @transform_2(%arg0: i32) -> (i32, i32) {
    %c0_i32 = arith.constant 0 : i32
    %c0_i32_0 = arith.constant 0 : i32
    %c0_i32_1 = arith.constant 0 : i32
    return %c0_i32, %c0_i32_0 : i32, i32
  }
  func.func @transform_3(%arg0: i32) -> (i32, i32) {
    %c0_i32 = arith.constant 0 : i32
    %c0_i32_0 = arith.constant 0 : i32
    return %arg0, %c0_i32 : i32, i32
  }
}

</mosaic_0001>

<llo_original>
// kernel: net_forward.1
$region0: #{net_forward.1}
  #allocation0 [shape = 'u32[]', space=smem, size = 0x4, offset = 0x4, fixed_abs, tag = 'smem constant byte address 0x4 - core index']
  #allocation1 [shape = 'u32[72,128]{1,0:T(1,128)}', space=vmem, size = 0x9000, scoped, tag = 'internal scratch']
  %s0 = inlined_call_operand.vmem [shape: f32[8,4], index: 0, kind: input, shape index: {}]
  %s1 = inlined_call_operand.hbm [shape: bf16[144,128], index: 1, kind: input, shape index: {}]
  %s2 = inlined_call_operand.hbm [shape: f32[16,128], index: 2, kind: input, shape index: {}]
  %s3 = inlined_call_operand.vmem [shape: f32[8,128], index: 3, kind: output, shape index: {}]
  %s4 = sld [smem:[#allocation0]]
  $region30: #{net_forward.1} parent=0
    _
  %s6 = ssub.s32 1, %s4
  %s7 = scalar_select 0, %s6, %s4
  $region1: #{net_forward.1} parent=0
    #allocation2 [shape = 'u8[36864]{0}', space=vmem, size = 0x9000, scoped, tag = 'input window, operand 1, single buffered']
    #allocation3 [shape = 's32[1]{0}', space=sflag, size = 0x4, scoped, tag = 'scoped memory for net_forward.1']
    #allocation4 [shape = 'u8[8192]{0}', space=vmem, size = 0x2000, scoped, tag = 'input window, operand 2, single buffered']
    #allocation5 [shape = 's32[1]{0}', space=sflag, size = 0x4, scoped, tag = 'scoped memory for net_forward.1']
    %8 = vsyncpa [#allocation3], 0
    %9 = vsyncpa [#allocation5], 0
    // Predicated region
    $region2: #{net_forward.1} parent=1 // pred_check
      _
    $region3: #{net_forward.1} parent=1 // pred_check_branch
      %11 = sbr.rel (0) target = $region5
    $region4: #{net_forward.1} parent=1 // pred_region
      _
    $region5: #{net_forward.1} parent=1 // pred_fallthru
      _
    // Predicated region
    $region6: #{net_forward.1} parent=1 // pred_check
      _
    $region7: #{net_forward.1} parent=1 // pred_check_branch
      %13 = sbr.rel (0) target = $region9
    $region8: #{net_forward.1} parent=1 // pred_region
      %15 = vsyncadd [#allocation3], 0
      %s16 = sshll.u32 %s1, 4
      %s17 = int_to_ptr.hbm [resolvable:$true] %s16
      %s18 = sshll.u32 [#allocation2], 4
      %s19 = int_to_ptr.vmem [resolvable:$true] %s18
      %24 = dma.hbm_to_vmem [thread:$0]  %s17, 1152, %s19, [#allocation3], 64, 64, 4
    $region9: #{net_forward.1} parent=1 // pred_fallthru
      _
    // Predicated region
    $region10: #{net_forward.1} parent=1 // pred_check
      _
    $region11: #{net_forward.1} parent=1 // pred_check_branch
      %26 = sbr.rel (0) target = $region13
    $region12: #{net_forward.1} parent=1 // pred_region
      %28 = vsyncadd [#allocation5], 0
      %s29 = sshll.u32 %s2, 4
      %s30 = int_to_ptr.hbm [resolvable:$true] %s29
      %s31 = sshll.u32 [#allocation4], 4
      %s32 = int_to_ptr.vmem [resolvable:$true] %s31
      %37 = dma.hbm_to_vmem [thread:$0]  %s30, 256, %s32, [#allocation5], 128, 128, 8
    $region13: #{net_forward.1} parent=1 // pred_fallthru
      _
    // Predicated region
    $region14: #{net_forward.1} parent=1 // pred_check
      _
    $region15: #{net_forward.1} parent=1 // pred_check_branch
      %39 = sbr.rel (0) target = $region17
    $region16: #{net_forward.1} parent=1 // pred_region
      %41 = dma.done [#allocation3], 1152
    $region17: #{net_forward.1} parent=1 // pred_fallthru
      _
    // Predicated region
    $region18: #{net_forward.1} parent=1 // pred_check
      _
    $region19: #{net_forward.1} parent=1 // pred_check_branch
      %43 = sbr.rel (0) target = $region21
    $region20: #{net_forward.1} parent=1 // pred_region
      %45 = dma.done [#allocation5], 256
    $region21: #{net_forward.1} parent=1 // pred_fallthru
      _
    %v47 = vld [vmem:[%s0] sm:$0xff]
    %v48 = vpack.c.bf16 %v47, %v47
    %v49 = vld [vmem:[#allocation2] sm:$0x3]
    %v50 = vld [vmem:[#allocation2 + $0x8] sm:$0xf]
    %v51 = vld [vmem:[#allocation2 + $0xc] sm:$0xf]
    %v52 = vld [vmem:[#allocation2 + $0x10] sm:$0xf]
    %v53 = vld [vmem:[#allocation2 + $0x14] sm:$0xf]
    %v54 = vld [vmem:[#allocation2 + $0x18] sm:$0xf]
    %v55 = vld [vmem:[#allocation2 + $0x1c] sm:$0xf]
    %v56 = vld [vmem:[#allocation2 + $0x20] sm:$0xf]
    %v57 = vld [vmem:[#allocation2 + $0x24] sm:$0xf]
    %v58 = vld [vmem:[#allocation2 + $0x28] sm:$0xf]
    %v59 = vld [vmem:[#allocation2 + $0x2c] sm:$0xf]
    %v60 = vld [vmem:[#allocation2 + $0x30] sm:$0xf]
    %v61 = vld [vmem:[#allocation2 + $0x34] sm:$0xf]
    %v62 = vld [vmem:[#allocation2 + $0x38] sm:$0xf]
    %v63 = vld [vmem:[#allocation2 + $0x3c] sm:$0xf]
    %v64 = vld [vmem:[#allocation2 + $0x40] sm:$0xf]
    %v65 = vld [vmem:[#allocation2 + $0x44] sm:$0xf]
    %v66 = vld [vmem:[#allocation4] sm:$0x1]
    %v67 = vld [vmem:[#allocation4 + $0x8] sm:$0x1]
    %v68 = vperm.slane %v66, 0
    %vm69 = vcmask 31744
    %v71 = vsel %vm69, %v48, 0
    %vm73 = vcmask 1041408
    %v75 = vsel %vm73, %v49, 0
    %77 = vmatpush.bf16.msra.mxu0 0
    %78 = vmatpush.bf16.msra.mxu0 0
    %79 = vmatpush.bf16.msra.mxu0 0
    %80 = vmatpush.bf16.msra.mxu0 0
    %81 = vmatpush.bf16.msra.mxu0 0
    %82 = vmatpush.bf16.msra.mxu0 0
    %83 = vmatpush.bf16.msra.mxu0 0
    %84 = vmatpush.bf16.msra.mxu0 %v75
    %85 = vmatmul.bf16.gmra.mxu0 %v71
    %v86 = vpop.f32.mrf.mxu0
    %v87 = vadd.f32 %v68, %v86
    %v88 = vpop.f32.mrf.mxu0
    %89 = vdwg.mxu0
    %v90 = vmax.f32 %v87, 0.0
    %v91 = vpack.c.bf16 %v90, %v90
    %v92 = vperm.slane %v67, 0
    %v109 = vunpack.c.l.b16 %v50
    %v110 = vunpack.c.l.b16 %v51
    %v111 = vunpack.c.l.b16 %v52
    %v112 = vunpack.c.l.b16 %v53
    %v113 = vunpack.c.l.b16 %v54
    %v114 = vunpack.c.l.b16 %v55
    %v115 = vunpack.c.l.b16 %v56
    %v116 = vunpack.c.l.b16 %v57
    %v117 = vunpack.c.l.b16 %v58
    %v118 = vunpack.c.l.b16 %v59
    %v119 = vunpack.c.l.b16 %v60
    %v120 = vunpack.c.l.b16 %v61
    %v121 = vunpack.c.l.b16 %v62
    %v122 = vunpack.c.l.b16 %v63
    %v123 = vunpack.c.l.b16 %v64
    %v124 = vunpack.c.l.b16 %v65
    %v125 = vpack.c.b16 %v110, %v109
    %v126 = vpack.c.b16 %v112, %v111
    %v127 = vpack.c.b16 %v114, %v113
    %v128 = vpack.c.b16 %v116, %v115
    %v129 = vpack.c.b16 %v118, %v117
    %v130 = vpack.c.b16 %v120, %v119
    %v131 = vpack.c.b16 %v122, %v121
    %v132 = vpack.c.b16 %v124, %v123
    %141 = vmatpush.bf16.msra.mxu0 %v132
    %142 = vmatpush.bf16.msra.mxu0 %v131
    %143 = vmatpush.bf16.msra.mxu0 %v130
    %144 = vmatpush.bf16.msra.mxu0 %v129
    %145 = vmatpush.bf16.msra.mxu0 %v128
    %146 = vmatpush.bf16.msra.mxu0 %v127
    %147 = vmatpush.bf16.msra.mxu0 %v126
    %148 = vmatpush.bf16.msra.mxu0 %v125
    %149 = vmatmul.bf16.gmra.mxu0 %v91
    %v150 = vpop.f32.mrf.mxu0
    %v151 = vadd.f32 %v92, %v150
    %v152 = vpop.f32.mrf.mxu0
    %153 = vdwg.mxu0
    %154 = vst [vmem:[%s3] sm:$0xff] %v151
    // Predicated region
    $region22: #{net_forward.1} parent=1 // pred_check
      _
    $region23: #{net_forward.1} parent=1 // pred_check_branch
      %156 = sbr.rel (0) target = $region25
    $region24: #{net_forward.1} parent=1 // pred_region
      _
    $region25: #{net_forward.1} parent=1 // pred_fallthru
      _
    // Predicated region
    $region26: #{net_forward.1} parent=1 // pred_check
      _
    $region27: #{net_forward.1} parent=1 // pred_check_branch
      %158 = sbr.rel (0) target = $region29
    $region28: #{net_forward.1} parent=1 // pred_region
      _
    $region29: #{net_forward.1} parent=1 // pred_fallthru
      _
    %159 = vsyncpa [#allocation3], 1
    %160 = vsyncpa [#allocation5], 1

</llo_original>
